<compile_context>
chip_gen: v6e
topology: v6e:2x2x1
jax: 0.10.0
libtpu: 0.0.40
codegen_flags: <defaults>
</compile_context>

<pallas_src>
import numpy as np
import jax
import jax.numpy as jnp
from jax.experimental import pallas as pl
from jax.experimental.pallas import tpu as pltpu

# --- constants matching the PyTorch module -------------------------------
L = 7                      # PositionalMapping L
SCALE = 1.0                # PositionalMapping scale
PI = 3.1415927410125732    # float32 pi used in the reference
NEG_SLOPE = 0.2            # LeakyReLU negative slope
H_DIM = 128                # hidden width
LANE = 128                 # TPU lane width

_HIGHEST = jax.lax.Precision.HIGHEST


def _round_up(n, m):
    return ((n + m - 1) // m) * m


def _leaky_relu(x):
    return jnp.where(x >= 0.0, x, NEG_SLOPE * x)


# ------------------------------ kernel ------------------------------------
def mlp_kernel(x_ref, rep_ref, phase_ref, w1id_ref, w1sc_ref, b1_ref,
               w2_ref, b2_ref, w3_ref, b3_ref, w4_ref, b4_ref, o_ref):
    x = x_ref[...]                                       # (TB, D) f32

    # Fused positional-mapping arguments, lane-dense:
    #   cols [0, 56)   : 2^i*pi*x_d            -> sin(arg)
    #   cols [56, 112) : 2^i*pi*x_d + pi/2     -> sin(arg) == cos(2^i*pi*x_d)
    #   cols [112,128) : exactly 0 (pad; matching W1 rows are 0)
    # The rep matmul stays HIGHEST so arguments up to ~200 rad keep f32
    # accuracy before the single dense sin.
    args = jnp.dot(x, rep_ref[...], precision=_HIGHEST,
                   preferred_element_type=jnp.float32) + phase_ref[...]
    s = jnp.sin(args)                                    # ONE transcendental pass

    def dot_bf16(a, w_ref):
        # single-pass bf16 MXU matmul, f32 accumulation
        return jnp.dot(a.astype(jnp.bfloat16), w_ref[...],
                       preferred_element_type=jnp.float32)

    # Layer 1 = identity contribution + fused sin/cos contribution.
    h = dot_bf16(x, w1id_ref) + dot_bf16(s, w1sc_ref) + b1_ref[...]
    h = _leaky_relu(h)
    h = _leaky_relu(dot_bf16(h, w2_ref) + b2_ref[...])
    h = _leaky_relu(dot_bf16(h, w3_ref) + b3_ref[...])
    o_ref[...] = dot_bf16(h, w4_ref) + b4_ref[...]       # (TB, out_dim), no pad lanes


# ------------------------------ params ------------------------------------
def init_params(key, input_dim, output_dim):
    """PyTorch-like uniform init; weights stored as (in, out) = W^T."""
    map_dim = input_dim * (2 * L + 1)
    dims = [(map_dim, H_DIM), (H_DIM, H_DIM), (H_DIM, H_DIM), (H_DIM, output_dim)]
    params = {}
    keys = jax.random.split(key, 2 * len(dims))
    for i, (d_in, d_out) in enumerate(dims):
        bound = 1.0 / float(np.sqrt(d_in))
        params[f"w{i+1}"] = jax.random.uniform(
            keys[2 * i], (d_in, d_out), jnp.float32, -bound, bound)
        params[f"b{i+1}"] = jax.random.uniform(
            keys[2 * i + 1], (1, d_out), jnp.float32, -bound, bound)
    return params


def prepare_kernel_params(params, input_dim):
    """Split / pad / re-lay-out weights into the kernel layout.

    Call ONCE per parameter set and reuse the result (hoisted out of the
    per-forward path per the perf review).
    """
    D = input_dim
    F = L * D                                    # 56: sin (== cos) feature count
    F2 = 2 * F                                   # 112: fused sin+cos feature count
    F2_PAD = _round_up(max(F2, LANE), LANE)      # 128

    # rep2[d, i*D + d]     = scale * 2^i * pi   (sin block)
    # rep2[d, F + i*D + d] = scale * 2^i * pi   (cos block, +pi/2 phase below)
    rep = np.zeros((D, F2_PAD), np.float32)
    phase = np.zeros((1, F2_PAD), np.float32)
    for i in range(L):
        freq = SCALE * (2.0 ** i) * PI
        for d in range(D):
            rep[d, i * D + d] = freq
            rep[d, F + i * D + d] = freq
    phase[0, F:F2] = PI / 2.0                    # sin(t + pi/2) == cos(t)

    # W1 row order (in,out layout): [identity D rows, sin0, cos0, sin1, cos1, ...]
    w1 = params["w1"]
    w1_id = w1[:D]                               # (D, H); x*scale/scale == x
    w1_rest = w1[D:].reshape(L, 2, D, H_DIM)
    w1_sin = w1_rest[:, 0].reshape(F, H_DIM) / SCALE
    w1_cos = w1_rest[:, 1].reshape(F, H_DIM) / SCALE
    w1_sc = jnp.concatenate([w1_sin, w1_cos], axis=0)        # (112, H)
    w1_sc = jnp.pad(w1_sc, ((0, F2_PAD - F2), (0, 0)))       # zero pad rows

    bf = lambda a: a.astype(jnp.bfloat16)
    return dict(
        rep=jnp.asarray(rep), phase=jnp.asarray(phase),
        w1_id=bf(w1_id), w1_sc=bf(w1_sc), b1=params["b1"],
        w2=bf(params["w2"]), b2=params["b2"],
        w3=bf(params["w3"]), b3=params["b3"],
        w4=bf(params["w4"]), b4=params["b4"])


# ------------------------------ wrapper ------------------------------------
def _resident_spec(shape):
    """Full-extent block with a constant index -> stays VMEM-resident."""
    zeros = (0,) * len(shape)
    return pl.BlockSpec(shape, lambda b, _z=zeros: _z)


@jax.jit
def mlp_forward(x, kp):
    B, D = x.shape
    out_dim = kp["w4"].shape[1]

    # Batch tiling: big tiles (amortize ~0.35us/step), but >= 2 balanced steps
    # for any non-tiny batch so the "parallel" axis feeds both TCs on v7x.
    tb_full = _round_up(B, 8)
    if tb_full <= 16:
        tile_b = tb_full                          # too small to split
    elif tb_full <= 1024:
        tile_b = _round_up((B + 1) // 2, 8)       # 2 balanced grid steps
    else:
        tile_b = 512                              # large batches: 512 rows/step
    b_pad = _round_up(B, tile_b)
    x_p = jnp.pad(x, ((0, b_pad - B), (0, 0)))

    ordered = (kp["rep"], kp["phase"], kp["w1_id"], kp["w1_sc"], kp["b1"],
               kp["w2"], kp["b2"], kp["w3"], kp["b3"], kp["w4"], kp["b4"])

    out = pl.pallas_call(
        mlp_kernel,
        out_shape=jax.ShapeDtypeStruct((b_pad, out_dim), jnp.float32),
        grid=(b_pad // tile_b,),
        in_specs=[pl.BlockSpec((tile_b, D), lambda b: (b, 0))]
                 + [_resident_spec(a.shape) for a in ordered],
        out_specs=pl.BlockSpec((tile_b, out_dim), lambda b: (b, 0)),
        compiler_params=pltpu.CompilerParams(
            dimension_semantics=("parallel",)),
    )(x_p, *ordered)
    return out[:B]                                # row un-pad only; no lane slice


# ------------------------------ reference ----------------------------------
def mlp_reference(x, params):
    """Pure-JAX mirror of the PyTorch MLP forward (f32, concatenation form)."""
    dot = lambda a, b: jnp.dot(a, b, precision=_HIGHEST)
    h = x * SCALE
    feats = [h]
    for i in range(L):
        arg = (2.0 ** i) * PI * h
        feats.append(jnp.sin(arg))
        feats.append(jnp.cos(arg))
    h = jnp.concatenate(feats, axis=-1) / SCALE
    h = _leaky_relu(dot(h, params["w1"]) + params["b1"])
    h = _leaky_relu(dot(h, params["w2"]) + params["b2"])
    h = _leaky_relu(dot(h, params["w3"]) + params["b3"])
    return dot(h, params["w4"]) + params["b4"]


if __name__ == "__main__":
    key = jax.random.PRNGKey(0)
    k_x, k_p, k_x2 = jax.random.split(key, 3)

    batch, input_dim, output_dim = 8, 8, 4
    x = jax.random.normal(k_x, (batch, input_dim), jnp.float32)
    params = init_params(k_p, input_dim, output_dim)
    kp = prepare_kernel_params(params, input_dim)   # hoisted: built once, reused

    out = jax.block_until_ready(mlp_forward(x, kp))
    ref = mlp_reference(x, params)
    assert out.shape == (batch, output_dim)
    # Tolerance reflects single-pass bf16 MXU dots (per perf review); the
    # sin/cos argument matmul stays HIGHEST so the mapping itself is f32-exact.
    assert jnp.allclose(out, ref, atol=1e-2, rtol=1e-2), "mismatch (small batch)"

    # Exercise the multi-step batched grid path (2 balanced steps, padded rows).
    batch2 = 260
    x2 = jax.random.normal(k_x2, (batch2, input_dim), jnp.float32)
    out2 = jax.block_until_ready(mlp_forward(x2, kp))
    ref2 = mlp_reference(x2, params)
    assert out2.shape == (batch2, output_dim)
    assert jnp.allclose(out2, ref2, atol=1e-2, rtol=1e-2), "mismatch (batched)"

    print("KERNEL_OK")
</pallas_src>

<mosaic_0001>
module attributes {stable_mosaic.version = 11 : i64} {
  func.func @mlp_kernel(%arg0: i32, %arg1: memref<8x8xf32, #tpu.memory_space<vmem>>, %arg2: memref<8x128xf32, #tpu.memory_space<vmem>>, %arg3: memref<1x128xf32, #tpu.memory_space<vmem>>, %arg4: memref<8x128xbf16, #tpu.memory_space<vmem>>, %arg5: memref<128x128xbf16, #tpu.memory_space<vmem>>, %arg6: memref<1x128xf32, #tpu.memory_space<vmem>>, %arg7: memref<128x128xbf16, #tpu.memory_space<vmem>>, %arg8: memref<1x128xf32, #tpu.memory_space<vmem>>, %arg9: memref<128x128xbf16, #tpu.memory_space<vmem>>, %arg10: memref<1x128xf32, #tpu.memory_space<vmem>>, %arg11: memref<128x4xbf16, #tpu.memory_space<vmem>>, %arg12: memref<1x4xf32, #tpu.memory_space<vmem>>, %arg13: memref<8x4xf32, #tpu.memory_space<vmem>>) attributes {dimension_semantics = [#tpu.dimension_semantics<parallel>], iteration_bounds = array<i64: 1>, scalar_prefetch = 0 : i64, scratch_operands = 0 : i64, tpu.core_type = #tpu.core_type<tc>, window_params = [{transform_indices = @transform_0, window_bounds = array<i64: 8, 8>}, {pipeline_mode = #tpu.pipeline_mode<synchronous>, transform_indices = @transform_1, window_bounds = array<i64: 8, 128>}, {pipeline_mode = #tpu.pipeline_mode<synchronous>, transform_indices = @transform_2, window_bounds = array<i64: 1, 128>}, {pipeline_mode = #tpu.pipeline_mode<synchronous>, transform_indices = @transform_3, window_bounds = array<i64: 8, 128>}, {pipeline_mode = #tpu.pipeline_mode<synchronous>, transform_indices = @transform_4, window_bounds = array<i64: 128, 128>}, {pipeline_mode = #tpu.pipeline_mode<synchronous>, transform_indices = @transform_5, window_bounds = array<i64: 1, 128>}, {pipeline_mode = #tpu.pipeline_mode<synchronous>, transform_indices = @transform_6, window_bounds = array<i64: 128, 128>}, {pipeline_mode = #tpu.pipeline_mode<synchronous>, transform_indices = @transform_7, window_bounds = array<i64: 1, 128>}, {pipeline_mode = #tpu.pipeline_mode<synchronous>, transform_indices = @transform_8, window_bounds = array<i64: 128, 128>}, {pipeline_mode = #tpu.pipeline_mode<synchronous>, transform_indices = @transform_9, window_bounds = array<i64: 1, 128>}, {pipeline_mode = #tpu.pipeline_mode<synchronous>, transform_indices = @transform_10, window_bounds = array<i64: 128, 4>}, {pipeline_mode = #tpu.pipeline_mode<synchronous>, transform_indices = @transform_11, window_bounds = array<i64: 1, 4>}, {transform_indices = @transform_12, window_bounds = array<i64: 8, 4>}]} {
    %c0 = arith.constant 0 : index
    %c0_0 = arith.constant 0 : index
    %0 = vector.load %arg1[%c0, %c0_0] : memref<8x8xf32, #tpu.memory_space<vmem>>, vector<8x8xf32>
    %c0_1 = arith.constant 0 : index
    %c0_2 = arith.constant 0 : index
    %1 = vector.load %arg2[%c0_1, %c0_2] : memref<8x128xf32, #tpu.memory_space<vmem>>, vector<8x128xf32>
    %cst = arith.constant dense<0.000000e+00> : vector<8x128xf32>
    %2 = tpu.matmul %0, %1, %cst {dimension_numbers = #tpu.dot_dimension_numbers<[1], [0], [0], [1], [0, 0, 1, 1], [], []>, precision = #tpu.contract_precision<fp32>} : vector<8x8xf32>, vector<8x128xf32>, vector<8x128xf32> -> vector<8x128xf32>
    %c0_3 = arith.constant 0 : index
    %c0_4 = arith.constant 0 : index
    %3 = vector.load %arg3[%c0_3, %c0_4] : memref<1x128xf32, #tpu.memory_space<vmem>>, vector<1x128xf32>
    %4 = vector.broadcast %3 : vector<1x128xf32> to vector<8x128xf32>
    %5 = arith.addf %2, %4 : vector<8x128xf32>
    %6 = math.sin %5 : vector<8x128xf32>
    %7 = arith.truncf %0 : vector<8x8xf32> to vector<8x8xbf16>
    %c0_5 = arith.constant 0 : index
    %c0_6 = arith.constant 0 : index
    %8 = vector.load %arg4[%c0_5, %c0_6] : memref<8x128xbf16, #tpu.memory_space<vmem>>, vector<8x128xbf16>
    %cst_7 = arith.constant dense<0.000000e+00> : vector<8x128xf32>
    %9 = tpu.matmul %7, %8, %cst_7 {dimension_numbers = #tpu.dot_dimension_numbers<[1], [0], [0], [1], [0, 0, 1, 1], [], []>} : vector<8x8xbf16>, vector<8x128xbf16>, vector<8x128xf32> -> vector<8x128xf32>
    %10 = arith.truncf %6 : vector<8x128xf32> to vector<8x128xbf16>
    %c0_8 = arith.constant 0 : index
    %c0_9 = arith.constant 0 : index
    %11 = vector.load %arg5[%c0_8, %c0_9] : memref<128x128xbf16, #tpu.memory_space<vmem>>, vector<128x128xbf16>
    %cst_10 = arith.constant dense<0.000000e+00> : vector<8x128xf32>
    %12 = tpu.matmul %10, %11, %cst_10 {dimension_numbers = #tpu.dot_dimension_numbers<[1], [0], [0], [1], [0, 0, 1, 1], [], []>} : vector<8x128xbf16>, vector<128x128xbf16>, vector<8x128xf32> -> vector<8x128xf32>
    %13 = arith.addf %9, %12 : vector<8x128xf32>
    %c0_11 = arith.constant 0 : index
    %c0_12 = arith.constant 0 : index
    %14 = vector.load %arg6[%c0_11, %c0_12] : memref<1x128xf32, #tpu.memory_space<vmem>>, vector<1x128xf32>
    %15 = vector.broadcast %14 : vector<1x128xf32> to vector<8x128xf32>
    %16 = arith.addf %13, %15 : vector<8x128xf32>
    %cst_13 = arith.constant 0.000000e+00 : f32
    %17 = vector.broadcast %cst_13 : f32 to vector<8x128xf32>
    %18 = arith.cmpf oge, %16, %17 : vector<8x128xf32>
    %cst_14 = arith.constant 2.000000e-01 : f32
    %19 = vector.broadcast %cst_14 : f32 to vector<8x128xf32>
    %20 = arith.mulf %19, %16 : vector<8x128xf32>
    %21 = arith.select %18, %16, %20 : vector<8x128xi1>, vector<8x128xf32>
    %22 = arith.truncf %21 : vector<8x128xf32> to vector<8x128xbf16>
    %c0_15 = arith.constant 0 : index
    %c0_16 = arith.constant 0 : index
    %23 = vector.load %arg7[%c0_15, %c0_16] : memref<128x128xbf16, #tpu.memory_space<vmem>>, vector<128x128xbf16>
    %cst_17 = arith.constant dense<0.000000e+00> : vector<8x128xf32>
    %24 = tpu.matmul %22, %23, %cst_17 {dimension_numbers = #tpu.dot_dimension_numbers<[1], [0], [0], [1], [0, 0, 1, 1], [], []>} : vector<8x128xbf16>, vector<128x128xbf16>, vector<8x128xf32> -> vector<8x128xf32>
    %c0_18 = arith.constant 0 : index
    %c0_19 = arith.constant 0 : index
    %25 = vector.load %arg8[%c0_18, %c0_19] : memref<1x128xf32, #tpu.memory_space<vmem>>, vector<1x128xf32>
    %26 = vector.broadcast %25 : vector<1x128xf32> to vector<8x128xf32>
    %27 = arith.addf %24, %26 : vector<8x128xf32>
    %cst_20 = arith.constant 0.000000e+00 : f32
    %28 = vector.broadcast %cst_20 : f32 to vector<8x128xf32>
    %29 = arith.cmpf oge, %27, %28 : vector<8x128xf32>
    %cst_21 = arith.constant 2.000000e-01 : f32
    %30 = vector.broadcast %cst_21 : f32 to vector<8x128xf32>
    %31 = arith.mulf %30, %27 : vector<8x128xf32>
    %32 = arith.select %29, %27, %31 : vector<8x128xi1>, vector<8x128xf32>
    %33 = arith.truncf %32 : vector<8x128xf32> to vector<8x128xbf16>
    %c0_22 = arith.constant 0 : index
    %c0_23 = arith.constant 0 : index
    %34 = vector.load %arg9[%c0_22, %c0_23] : memref<128x128xbf16, #tpu.memory_space<vmem>>, vector<128x128xbf16>
    %cst_24 = arith.constant dense<0.000000e+00> : vector<8x128xf32>
    %35 = tpu.matmul %33, %34, %cst_24 {dimension_numbers = #tpu.dot_dimension_numbers<[1], [0], [0], [1], [0, 0, 1, 1], [], []>} : vector<8x128xbf16>, vector<128x128xbf16>, vector<8x128xf32> -> vector<8x128xf32>
    %c0_25 = arith.constant 0 : index
    %c0_26 = arith.constant 0 : index
    %36 = vector.load %arg10[%c0_25, %c0_26] : memref<1x128xf32, #tpu.memory_space<vmem>>, vector<1x128xf32>
    %37 = vector.broadcast %36 : vector<1x128xf32> to vector<8x128xf32>
    %38 = arith.addf %35, %37 : vector<8x128xf32>
    %cst_27 = arith.constant 0.000000e+00 : f32
    %39 = vector.broadcast %cst_27 : f32 to vector<8x128xf32>
    %40 = arith.cmpf oge, %38, %39 : vector<8x128xf32>
    %cst_28 = arith.constant 2.000000e-01 : f32
    %41 = vector.broadcast %cst_28 : f32 to vector<8x128xf32>
    %42 = arith.mulf %41, %38 : vector<8x128xf32>
    %43 = arith.select %40, %38, %42 : vector<8x128xi1>, vector<8x128xf32>
    %44 = arith.truncf %43 : vector<8x128xf32> to vector<8x128xbf16>
    %c0_29 = arith.constant 0 : index
    %c0_30 = arith.constant 0 : index
    %45 = vector.load %arg11[%c0_29, %c0_30] : memref<128x4xbf16, #tpu.memory_space<vmem>>, vector<128x4xbf16>
    %cst_31 = arith.constant dense<0.000000e+00> : vector<8x4xf32>
    %46 = tpu.matmul %44, %45, %cst_31 {dimension_numbers = #tpu.dot_dimension_numbers<[1], [0], [0], [1], [0, 0, 1, 1], [], []>} : vector<8x128xbf16>, vector<128x4xbf16>, vector<8x4xf32> -> vector<8x4xf32>
    %c0_32 = arith.constant 0 : index
    %c0_33 = arith.constant 0 : index
    %47 = vector.load %arg12[%c0_32, %c0_33] : memref<1x4xf32, #tpu.memory_space<vmem>>, vector<1x4xf32>
    %48 = vector.broadcast %47 : vector<1x4xf32> to vector<8x4xf32>
    %49 = arith.addf %46, %48 : vector<8x4xf32>
    %c0_34 = arith.constant 0 : index
    %c0_35 = arith.constant 0 : index
    %50 = vector.load %arg13[%c0_34, %c0_35] : memref<8x4xf32, #tpu.memory_space<vmem>>, vector<8x4xf32>
    tpu.vector_store %arg13[%c0_34, %c0_35], %49 {strides = array<i32>} : memref<8x4xf32, #tpu.memory_space<vmem>>, vector<8x4xf32>,
    return
  }
  func.func @transform_0(%arg0: i32) -> (i32, i32) {
    %c0_i32 = arith.constant 0 : i32
    %c0_i32_0 = arith.constant 0 : i32
    return %arg0, %c0_i32 : i32, i32
  }
  func.func @transform_1(%arg0: i32) -> (i32, i32) {
    %c0_i32 = arith.constant 0 : i32
    %c0_i32_0 = arith.constant 0 : i32
    %c0_i32_1 = arith.constant 0 : i32
    return %c0_i32, %c0_i32_0 : i32, i32
  }
  func.func @transform_2(%arg0: i32) -> (i32, i32) {
    %c0_i32 = arith.constant 0 : i32
    %c0_i32_0 = arith.constant 0 : i32
    %c0_i32_1 = arith.constant 0 : i32
    return %c0_i32, %c0_i32_0 : i32, i32
  }
  func.func @transform_3(%arg0: i32) -> (i32, i32) {
    %c0_i32 = arith.constant 0 : i32
    %c0_i32_0 = arith.constant 0 : i32
    %c0_i32_1 = arith.constant 0 : i32
    return %c0_i32, %c0_i32_0 : i32, i32
  }
  func.func @transform_4(%arg0: i32) -> (i32, i32) {
    %c0_i32 = arith.constant 0 : i32
    %c0_i32_0 = arith.constant 0 : i32
    %c0_i32_1 = arith.constant 0 : i32
    return %c0_i32, %c0_i32_0 : i32, i32
  }
  func.func @transform_5(%arg0: i32) -> (i32, i32) {
    %c0_i32 = arith.constant 0 : i32
    %c0_i32_0 = arith.constant 0 : i32
    %c0_i32_1 = arith.constant 0 : i32
    return %c0_i32, %c0_i32_0 : i32, i32
  }
  func.func @transform_6(%arg0: i32) -> (i32, i32) {
    %c0_i32 = arith.constant 0 : i32
    %c0_i32_0 = arith.constant 0 : i32
    %c0_i32_1 = arith.constant 0 : i32
    return %c0_i32, %c0_i32_0 : i32, i32
  }
  func.func @transform_7(%arg0: i32) -> (i32, i32) {
    %c0_i32 = arith.constant 0 : i32
    %c0_i32_0 = arith.constant 0 : i32
    %c0_i32_1 = arith.constant 0 : i32
    return %c0_i32, %c0_i32_0 : i32, i32
  }
  func.func @transform_8(%arg0: i32) -> (i32, i32) {
    %c0_i32 = arith.constant 0 : i32
    %c0_i32_0 = arith.constant 0 : i32
    %c0_i32_1 = arith.constant 0 : i32
    return %c0_i32, %c0_i32_0 : i32, i32
  }
  func.func @transform_9(%arg0: i32) -> (i32, i32) {
    %c0_i32 = arith.constant 0 : i32
    %c0_i32_0 = arith.constant 0 : i32
    %c0_i32_1 = arith.constant 0 : i32
    return %c0_i32, %c0_i32_0 : i32, i32
  }
  func.func @transform_10(%arg0: i32) -> (i32, i32) {
    %c0_i32 = arith.constant 0 : i32
    %c0_i32_0 = arith.constant 0 : i32
    %c0_i32_1 = arith.constant 0 : i32
    return %c0_i32, %c0_i32_0 : i32, i32
  }
  func.func @transform_11(%arg0: i32) -> (i32, i32) {
    %c0_i32 = arith.constant 0 : i32
    %c0_i32_0 = arith.constant 0 : i32
    %c0_i32_1 = arith.constant 0 : i32
    return %c0_i32, %c0_i32_0 : i32, i32
  }
  func.func @transform_12(%arg0: i32) -> (i32, i32) {
    %c0_i32 = arith.constant 0 : i32
    %c0_i32_0 = arith.constant 0 : i32
    return %arg0, %c0_i32 : i32, i32
  }
}

</mosaic_0001>

<llo_original>
// kernel: mlp_forward.1
$region0: #{mlp_forward.1}
  #allocation0 [shape = 'u32[]', space=smem, size = 0x4, offset = 0x4, fixed_abs, tag = 'smem constant byte address 0x4 - core index']
  #allocation1 [shape = 'u32[144,128]{1,0:T(1,128)}', space=vmem, size = 0x12000, scoped, tag = 'internal scratch']
  %s0 = inlined_call_operand.vmem [shape: f32[8,8], index: 0, kind: input, shape index: {}]
  %s1 = inlined_call_operand.vmem [shape: f32[8,128], index: 1, kind: input, shape index: {}]
  %s2 = inlined_call_operand.hbm [shape: f32[1,128], index: 2, kind: input, shape index: {}]
  %s3 = inlined_call_operand.hbm [shape: bf16[8,128], index: 3, kind: input, shape index: {}]
  %s4 = inlined_call_operand.vmem [shape: bf16[128,128], index: 4, kind: input, shape index: {}]
  %s5 = inlined_call_operand.hbm [shape: f32[1,128], index: 5, kind: input, shape index: {}]
  %s6 = inlined_call_operand.hbm [shape: bf16[128,128], index: 6, kind: input, shape index: {}]
  %s7 = inlined_call_operand.hbm [shape: f32[1,128], index: 7, kind: input, shape index: {}]
  %s8 = inlined_call_operand.hbm [shape: bf16[128,128], index: 8, kind: input, shape index: {}]
  %s9 = inlined_call_operand.hbm [shape: f32[1,128], index: 9, kind: input, shape index: {}]
  %s10 = inlined_call_operand.vmem [shape: bf16[128,4], index: 10, kind: input, shape index: {}]
  %s11 = inlined_call_operand.hbm [shape: f32[1,4], index: 11, kind: input, shape index: {}]
  %s12 = inlined_call_operand.vmem [shape: f32[8,4], index: 12, kind: output, shape index: {}]
  %s13 = sld [smem:[#allocation0]]
  $region90: #{mlp_forward.1} parent=0
    _
  %s15 = ssub.s32 1, %s13
  %s16 = scalar_select 0, %s15, %s13
  $region1: #{mlp_forward.1} parent=0
    #allocation2 [shape = 'u8[512]{0}', space=vmem, size = 0x400, scoped, tag = 'input window, operand 2, single buffered']
    #allocation3 [shape = 's32[1]{0}', space=sflag, size = 0x4, scoped, tag = 'scoped memory for mlp_forward.1']
    #allocation4 [shape = 'u8[2048]{0}', space=vmem, size = 0x800, scoped, tag = 'input window, operand 3, single buffered']
    #allocation5 [shape = 's32[1]{0}', space=sflag, size = 0x4, scoped, tag = 'scoped memory for mlp_forward.1']
    #allocation6 [shape = 'u8[512]{0}', space=vmem, size = 0x400, scoped, tag = 'input window, operand 5, single buffered']
    #allocation7 [shape = 'u8[32768]{0}', space=vmem, size = 0x8000, scoped, tag = 'input window, operand 6, single buffered']
    #allocation8 [shape = 's32[1]{0}', space=sflag, size = 0x4, scoped, tag = 'scoped memory for mlp_forward.1']
    #allocation9 [shape = 'u8[512]{0}', space=vmem, size = 0x400, scoped, tag = 'input window, operand 7, single buffered']
    #allocation10 [shape = 'u8[32768]{0}', space=vmem, size = 0x8000, scoped, tag = 'input window, operand 8, single buffered']
    #allocation11 [shape = 's32[1]{0}', space=sflag, size = 0x4, scoped, tag = 'scoped memory for mlp_forward.1']
    #allocation12 [shape = 'u8[512]{0}', space=vmem, size = 0x400, scoped, tag = 'input window, operand 9, single buffered']
    #allocation13 [shape = 'u8[512]{0}', space=vmem, size = 0x400, scoped, tag = 'input window, operand 11, single buffered']
    #allocation14 [shape = 's32[1]{0}', space=sflag, size = 0x4, scoped, tag = 'scoped memory for mlp_forward.1']
    %17 = vsyncpa [#allocation3], 0
    %18 = vsyncpa [#allocation5], 0
    %19 = vsyncpa [#allocation8], 0
    %20 = vsyncpa [#allocation11], 0
    %21 = vsyncpa [#allocation14], 0
    // Predicated region
    $region2: #{mlp_forward.1} parent=1 // pred_check
      _
    $region3: #{mlp_forward.1} parent=1 // pred_check_branch
      %23 = sbr.rel (0) target = $region5
    $region4: #{mlp_forward.1} parent=1 // pred_region
      _
    $region5: #{mlp_forward.1} parent=1 // pred_fallthru
      _
    // Predicated region
    $region6: #{mlp_forward.1} parent=1 // pred_check
      _
    $region7: #{mlp_forward.1} parent=1 // pred_check_branch
      %25 = sbr.rel (0) target = $region9
    $region8: #{mlp_forward.1} parent=1 // pred_region
      _
    $region9: #{mlp_forward.1} parent=1 // pred_fallthru
      _
    // Predicated region
    $region10: #{mlp_forward.1} parent=1 // pred_check
      _
    $region11: #{mlp_forward.1} parent=1 // pred_check_branch
      %27 = sbr.rel (0) target = $region13
    $region12: #{mlp_forward.1} parent=1 // pred_region
      %s29 = ssub.s32 16, 16
      %30 = vsyncadd [#allocation3], %s29
      %s32 = sshll.u32 [#allocation2], 4
      %s33 = int_to_ptr.vmem [resolvable:$true] %s32
      %35 = dma.hbm_to_vmem [thread:$0]  %s2, 16, %s33, [#allocation3]
    $region13: #{mlp_forward.1} parent=1 // pred_fallthru
      _
    // Predicated region
    $region14: #{mlp_forward.1} parent=1 // pred_check
      _
    $region15: #{mlp_forward.1} parent=1 // pred_check_branch
      %37 = sbr.rel (0) target = $region17
    $region16: #{mlp_forward.1} parent=1 // pred_region
      %s39 = ssub.s32 64, 64
      %40 = vsyncadd [#allocation5], %s39
      %s42 = sshll.u32 [#allocation4], 4
      %s43 = int_to_ptr.vmem [resolvable:$true] %s42
      %45 = dma.hbm_to_vmem [thread:$0]  %s3, 64, %s43, [#allocation5]
    $region17: #{mlp_forward.1} parent=1 // pred_fallthru
      _
    // Predicated region
    $region18: #{mlp_forward.1} parent=1 // pred_check
      _
    $region19: #{mlp_forward.1} parent=1 // pred_check_branch
      %47 = sbr.rel (0) target = $region21
    $region20: #{mlp_forward.1} parent=1 // pred_region
      _
    $region21: #{mlp_forward.1} parent=1 // pred_fallthru
      _
    // Predicated region
    $region22: #{mlp_forward.1} parent=1 // pred_check
      _
    $region23: #{mlp_forward.1} parent=1 // pred_check_branch
      %49 = sbr.rel (0) target = $region25
    $region24: #{mlp_forward.1} parent=1 // pred_region
      %s51 = ssub.s32 16, 16
      %52 = vsyncadd [#allocation5], %s51
      %s54 = sshll.u32 [#allocation6], 4
      %s55 = int_to_ptr.vmem [resolvable:$true] %s54
      %57 = dma.hbm_to_vmem [thread:$0]  %s5, 16, %s55, [#allocation5]
    $region25: #{mlp_forward.1} parent=1 // pred_fallthru
      _
    // Predicated region
    $region26: #{mlp_forward.1} parent=1 // pred_check
      _
    $region27: #{mlp_forward.1} parent=1 // pred_check_branch
      %59 = sbr.rel (0) target = $region29
    $region28: #{mlp_forward.1} parent=1 // pred_region
      %s61 = ssub.s32 1024, 1024
      %62 = vsyncadd [#allocation8], %s61
      %s63 = sshll.u32 [#allocation7], 4
      %s64 = int_to_ptr.vmem [resolvable:$true] %s63
      %69 = dma.hbm_to_vmem [thread:$0]  %s6, 1024, %s64, [#allocation8], 64, 64, 4
    $region29: #{mlp_forward.1} parent=1 // pred_fallthru
      _
    // Predicated region
    $region30: #{mlp_forward.1} parent=1 // pred_check
      _
    $region31: #{mlp_forward.1} parent=1 // pred_check_branch
      %71 = sbr.rel (0) target = $region33
    $region32: #{mlp_forward.1} parent=1 // pred_region
      %s73 = ssub.s32 16, 16
      %74 = vsyncadd [#allocation8], %s73
      %s76 = sshll.u32 [#allocation9], 4
      %s77 = int_to_ptr.vmem [resolvable:$true] %s76
      %79 = dma.hbm_to_vmem [thread:$0]  %s7, 16, %s77, [#allocation8]
    $region33: #{mlp_forward.1} parent=1 // pred_fallthru
      _
    // Predicated region
    $region34: #{mlp_forward.1} parent=1 // pred_check
      _
    $region35: #{mlp_forward.1} parent=1 // pred_check_branch
      %81 = sbr.rel (0) target = $region37
    $region36: #{mlp_forward.1} parent=1 // pred_region
      %s83 = ssub.s32 1024, 1024
      %84 = vsyncadd [#allocation11], %s83
      %s85 = sshll.u32 [#allocation10], 4
      %s86 = int_to_ptr.vmem [resolvable:$true] %s85
      %91 = dma.hbm_to_vmem [thread:$0]  %s8, 1024, %s86, [#allocation11], 64, 64, 4
    $region37: #{mlp_forward.1} parent=1 // pred_fallthru
      _
    // Predicated region
    $region38: #{mlp_forward.1} parent=1 // pred_check
      _
    $region39: #{mlp_forward.1} parent=1 // pred_check_branch
      %93 = sbr.rel (0) target = $region41
    $region40: #{mlp_forward.1} parent=1 // pred_region
      %s95 = ssub.s32 16, 16
      %96 = vsyncadd [#allocation11], %s95
      %s98 = sshll.u32 [#allocation12], 4
      %s99 = int_to_ptr.vmem [resolvable:$true] %s98
      %101 = dma.hbm_to_vmem [thread:$0]  %s9, 16, %s99, [#allocation11]
    $region41: #{mlp_forward.1} parent=1 // pred_fallthru
      _
    // Predicated region
    $region42: #{mlp_forward.1} parent=1 // pred_check
      _
    $region43: #{mlp_forward.1} parent=1 // pred_check_branch
      %103 = sbr.rel (0) target = $region45
    $region44: #{mlp_forward.1} parent=1 // pred_region
      _
    $region45: #{mlp_forward.1} parent=1 // pred_fallthru
      _
    // Predicated region
    $region46: #{mlp_forward.1} parent=1 // pred_check
      _
    $region47: #{mlp_forward.1} parent=1 // pred_check_branch
      %105 = sbr.rel (0) target = $region49
    $region48: #{mlp_forward.1} parent=1 // pred_region
      %s107 = ssub.s32 16, 16
      %108 = vsyncadd [#allocation14], %s107
      %s110 = sshll.u32 [#allocation13], 4
      %s111 = int_to_ptr.vmem [resolvable:$true] %s110
      %113 = dma.hbm_to_vmem [thread:$0]  %s11, 16, %s111, [#allocation14]
    $region49: #{mlp_forward.1} parent=1 // pred_fallthru
      _
    // Predicated region
    $region50: #{mlp_forward.1} parent=1 // pred_check
      _
    $region51: #{mlp_forward.1} parent=1 // pred_check_branch
      %115 = sbr.rel (0) target = $region53
    $region52: #{mlp_forward.1} parent=1 // pred_region
      %116 = dma.done [#allocation3], 16
    $region53: #{mlp_forward.1} parent=1 // pred_fallthru
      _
    // Predicated region
    $region54: #{mlp_forward.1} parent=1 // pred_check
      _
    $region55: #{mlp_forward.1} parent=1 // pred_check_branch
      %118 = sbr.rel (0) target = $region57
    $region56: #{mlp_forward.1} parent=1 // pred_region
      %119 = dma.done [#allocation5], 64
    $region57: #{mlp_forward.1} parent=1 // pred_fallthru
      _
    // Predicated region
    $region58: #{mlp_forward.1} parent=1 // pred_check
      _
    $region59: #{mlp_forward.1} parent=1 // pred_check_branch
      %121 = sbr.rel (0) target = $region61
    $region60: #{mlp_forward.1} parent=1 // pred_region
      %122 = dma.done [#allocation5], 16
    $region61: #{mlp_forward.1} parent=1 // pred_fallthru
      _
    // Predicated region
    $region62: #{mlp_forward.1} parent=1 // pred_check
      _
    $region63: #{mlp_forward.1} parent=1 // pred_check_branch
      %124 = sbr.rel (0) target = $region65
    $region64: #{mlp_forward.1} parent=1 // pred_region
      %125 = dma.done [#allocation8], 1024
    $region65: #{mlp_forward.1} parent=1 // pred_fallthru
      _
    // Predicated region
    $region66: #{mlp_forward.1} parent=1 // pred_check
      _
    $region67: #{mlp_forward.1} parent=1 // pred_check_branch
      %127 = sbr.rel (0) target = $region69
    $region68: #{mlp_forward.1} parent=1 // pred_region
      %128 = dma.done [#allocation8], 16
    $region69: #{mlp_forward.1} parent=1 // pred_fallthru
      _
    // Predicated region
    $region70: #{mlp_forward.1} parent=1 // pred_check
      _
    $region71: #{mlp_forward.1} parent=1 // pred_check_branch
      %130 = sbr.rel (0) target = $region73
    $region72: #{mlp_forward.1} parent=1 // pred_region
      %131 = dma.done [#allocation11], 1024
    $region73: #{mlp_forward.1} parent=1 // pred_fallthru
      _
    // Predicated region
    $region74: #{mlp_forward.1} parent=1 // pred_check
      _
    $region75: #{mlp_forward.1} parent=1 // pred_check_branch
      %133 = sbr.rel (0) target = $region77
    $region76: #{mlp_forward.1} parent=1 // pred_region
      %134 = dma.done [#allocation11], 16
    $region77: #{mlp_forward.1} parent=1 // pred_fallthru
      _
    // Predicated region
    $region78: #{mlp_forward.1} parent=1 // pred_check
      _
    $region79: #{mlp_forward.1} parent=1 // pred_check_branch
      %136 = sbr.rel (0) target = $region81
    $region80: #{mlp_forward.1} parent=1 // pred_region
      %137 = dma.done [#allocation14], 16
    $region81: #{mlp_forward.1} parent=1 // pred_fallthru
      _
    %v139 = vld [vmem:[%s0] sm:$0xff]
    %v140 = vld [vmem:[%s1] sm:$0xff]
    %v141 = vld [vmem:[#allocation2] sm:$0x1]
    %v143 = vlaneseq
    %v144 = vshrl.u32 %v143, 7
    %v145 = vsub.s32 0, %v144
    %v146 = vrot.slane %v141, %v145
    %vm148 = vcmask 64512
    %v150 = vsel %vm148, %v139, 0
    %152 = vmatprep.subr.mxu0 0.0
    %153 = vmatpush1.msra.mxu0 0.0
    %154 = vmatprep.subr.mxu0 0.0
    %155 = vmatpush1.msra.mxu0 0.0
    %156 = vmatprep.subr.mxu0 0.0
    %157 = vmatpush1.msra.mxu0 0.0
    %158 = vmatprep.subr.mxu0 0.0
    %159 = vmatpush1.msra.mxu0 0.0
    %160 = vmatprep.subr.mxu0 0.0
    %161 = vmatpush1.msra.mxu0 0.0
    %162 = vmatprep.subr.mxu0 0.0
    %163 = vmatpush1.msra.mxu0 0.0
    %164 = vmatprep.subr.mxu0 0.0
    %165 = vmatpush1.msra.mxu0 0.0
    %166 = vmatprep.subr.mxu0 0.0
    %167 = vmatpush1.msra.mxu0 0.0
    %168 = vmatprep.subr.mxu0 0.0
    %169 = vmatpush1.msra.mxu0 0.0
    %170 = vmatprep.subr.mxu0 0.0
    %171 = vmatpush1.msra.mxu0 0.0
    %172 = vmatprep.subr.mxu0 0.0
    %173 = vmatpush1.msra.mxu0 0.0
    %174 = vmatprep.subr.mxu0 0.0
    %175 = vmatpush1.msra.mxu0 0.0
    %176 = vmatprep.subr.mxu0 0.0
    %177 = vmatpush1.msra.mxu0 0.0
    %178 = vmatprep.subr.mxu0 0.0
    %179 = vmatpush1.msra.mxu0 0.0
    %180 = vmatprep.subr.mxu0 0.0
    %181 = vmatpush1.msra.mxu0 0.0
    %182 = vmatprep.subr.mxu0 0.0
    %v183 = vand.u32 %v140, 4294901760
    %184 = vmatpush1.msra.mxu0 %v183
    %185 = vmatprep.subr.mxu0 0.0
    %186 = vmatpush2.msra.mxu0 0.0
    %187 = vmatprep.subr.mxu0 0.0
    %188 = vmatpush2.msra.mxu0 0.0
    %189 = vmatprep.subr.mxu0 0.0
    %190 = vmatpush2.msra.mxu0 0.0
    %191 = vmatprep.subr.mxu0 0.0
    %192 = vmatpush2.msra.mxu0 0.0
    %193 = vmatprep.subr.mxu0 0.0
    %194 = vmatpush2.msra.mxu0 0.0
    %195 = vmatprep.subr.mxu0 0.0
    %196 = vmatpush2.msra.mxu0 0.0
    %197 = vmatprep.subr.mxu0 0.0
    %198 = vmatpush2.msra.mxu0 0.0
    %199 = vmatprep.subr.mxu0 0.0
    %200 = vmatpush2.msra.mxu0 0.0
    %201 = vmatprep.subr.mxu0 0.0
    %202 = vmatpush2.msra.mxu0 0.0
    %203 = vmatprep.subr.mxu0 0.0
    %204 = vmatpush2.msra.mxu0 0.0
    %205 = vmatprep.subr.mxu0 0.0
    %206 = vmatpush2.msra.mxu0 0.0
    %207 = vmatprep.subr.mxu0 0.0
    %208 = vmatpush2.msra.mxu0 0.0
    %209 = vmatprep.subr.mxu0 0.0
    %210 = vmatpush2.msra.mxu0 0.0
    %211 = vmatprep.subr.mxu0 0.0
    %212 = vmatpush2.msra.mxu0 0.0
    %213 = vmatprep.subr.mxu0 0.0
    %214 = vmatpush2.msra.mxu0 0.0
    %215 = vmatprep.subr.mxu0 0.0
    %216 = vmatpush2.msra.mxu0 0.0
    %217 = vmatprep.mubr.f32.mxu0 0.0
    %v218 = vand.u32 %v150, 4294901760
    %v219 = vsub.f32 %v150, %v218
    %v220 = vand.u32 %v219, 4294901760
    %v221 = vsub.f32 %v219, %v220
    %v222 = vand.u32 %v221, 4294901760
    %223 = vmatmul.mubr.f32.gmra.mxu0 %v222
    %v224 = vpop.f32.mrf.mxu0
    %v225 = vadd.f32 %v146, %v224
    %v226 = vpop.f32.mrf.mxu0
    %227 = vdwg.mxu0
    %228 = vmatprep.subr.mxu0 0.0
    %229 = vmatpush1.msra.mxu0 0.0
    %230 = vmatprep.subr.mxu0 0.0
    %231 = vmatpush1.msra.mxu0 0.0
    %232 = vmatprep.subr.mxu0 0.0
    %233 = vmatpush1.msra.mxu0 0.0
    %234 = vmatprep.subr.mxu0 0.0
    %235 = vmatpush1.msra.mxu0 0.0
    %236 = vmatprep.subr.mxu0 0.0
    %237 = vmatpush1.msra.mxu0 0.0
    %238 = vmatprep.subr.mxu0 0.0
    %239 = vmatpush1.msra.mxu0 0.0
    %240 = vmatprep.subr.mxu0 0.0
    %241 = vmatpush1.msra.mxu0 0.0
    %242 = vmatprep.subr.mxu0 0.0
    %243 = vmatpush1.msra.mxu0 0.0
    %244 = vmatprep.subr.mxu0 0.0
    %245 = vmatpush1.msra.mxu0 0.0
    %246 = vmatprep.subr.mxu0 0.0
    %247 = vmatpush1.msra.mxu0 0.0
    %248 = vmatprep.subr.mxu0 0.0
    %249 = vmatpush1.msra.mxu0 0.0
    %250 = vmatprep.subr.mxu0 0.0
    %251 = vmatpush1.msra.mxu0 0.0
    %252 = vmatprep.subr.mxu0 0.0
    %253 = vmatpush1.msra.mxu0 0.0
    %254 = vmatprep.subr.mxu0 0.0
    %255 = vmatpush1.msra.mxu0 0.0
    %256 = vmatprep.subr.mxu0 0.0
    %257 = vmatpush1.msra.mxu0 0.0
    %258 = vmatprep.subr.mxu0 0.0
    %v259 = vand.u32 %v140, 4294901760
    %v260 = vsub.f32 %v140, %v259
    %v261 = vand.u32 %v260, 4294901760
    %v262 = vsub.f32 %v260, %v261
    %v263 = vand.u32 %v262, 4294901760
    %264 = vmatpush1.msra.mxu0 %v263
    %265 = vmatprep.subr.mxu0 0.0
    %266 = vmatpush2.msra.mxu0 0.0
    %267 = vmatprep.subr.mxu0 0.0
    %268 = vmatpush2.msra.mxu0 0.0
    %269 = vmatprep.subr.mxu0 0.0
    %270 = vmatpush2.msra.mxu0 0.0
    %271 = vmatprep.subr.mxu0 0.0
    %272 = vmatpush2.msra.mxu0 0.0
    %273 = vmatprep.subr.mxu0 0.0
    %274 = vmatpush2.msra.mxu0 0.0
    %275 = vmatprep.subr.mxu0 0.0
    %276 = vmatpush2.msra.mxu0 0.0
    %277 = vmatprep.subr.mxu0 0.0
    %278 = vmatpush2.msra.mxu0 0.0
    %279 = vmatprep.subr.mxu0 0.0
    %280 = vmatpush2.msra.mxu0 0.0
    %281 = vmatprep.subr.mxu0 0.0
    %282 = vmatpush2.msra.mxu0 0.0
    %283 = vmatprep.subr.mxu0 0.0
    %284 = vmatpush2.msra.mxu0 0.0
    %285 = vmatprep.subr.mxu0 0.0
    %286 = vmatpush2.msra.mxu0 0.0
    %287 = vmatprep.subr.mxu0 0.0
    %288 = vmatpush2.msra.mxu0 0.0
    %289 = vmatprep.subr.mxu0 0.0
    %290 = vmatpush2.msra.mxu0 0.0
    %291 = vmatprep.subr.mxu0 0.0
    %292 = vmatpush2.msra.mxu0 0.0
    %293 = vmatprep.subr.mxu0 0.0
    %294 = vmatpush2.msra.mxu0 0.0
    %295 = vmatprep.subr.mxu0 0.0
    %296 = vmatpush2.msra.mxu0 0.0
    %297 = vmatprep.mubr.f32.mxu0 0.0
    %v298 = vand.u32 %v150, 4294901760
    %299 = vmatmul.mubr.f32.gmra.mxu0 %v298
    %v300 = vpop.f32.mrf.mxu0
    %v301 = vadd.f32 %v225, %v300
    %v302 = vpop.f32.mrf.mxu0
    %303 = vdwg.mxu0
    %304 = vmatprep.subr.mxu0 0.0
    %305 = vmatpush1.msra.mxu0 0.0
    %306 = vmatprep.subr.mxu0 0.0
    %307 = vmatpush1.msra.mxu0 0.0
    %308 = vmatprep.subr.mxu0 0.0
    %309 = vmatpush1.msra.mxu0 0.0
    %310 = vmatprep.subr.mxu0 0.0
    %311 = vmatpush1.msra.mxu0 0.0
    %312 = vmatprep.subr.mxu0 0.0
    %313 = vmatpush1.msra.mxu0 0.0
    %314 = vmatprep.subr.mxu0 0.0
    %315 = vmatpush1.msra.mxu0 0.0
    %316 = vmatprep.subr.mxu0 0.0
    %317 = vmatpush1.msra.mxu0 0.0
    %318 = vmatprep.subr.mxu0 0.0
    %319 = vmatpush1.msra.mxu0 0.0
    %320 = vmatprep.subr.mxu0 0.0
    %321 = vmatpush1.msra.mxu0 0.0
    %322 = vmatprep.subr.mxu0 0.0
    %323 = vmatpush1.msra.mxu0 0.0
    %324 = vmatprep.subr.mxu0 0.0
    %325 = vmatpush1.msra.mxu0 0.0
    %326 = vmatprep.subr.mxu0 0.0
    %327 = vmatpush1.msra.mxu0 0.0
    %328 = vmatprep.subr.mxu0 0.0
    %329 = vmatpush1.msra.mxu0 0.0
    %330 = vmatprep.subr.mxu0 0.0
    %331 = vmatpush1.msra.mxu0 0.0
    %332 = vmatprep.subr.mxu0 0.0
    %333 = vmatpush1.msra.mxu0 0.0
    %334 = vmatprep.subr.mxu0 0.0
    %v335 = vand.u32 %v140, 4294901760
    %v336 = vsub.f32 %v140, %v335
    %337 = vmatpush1.msra.mxu0 %v336
    %338 = vmatprep.subr.mxu0 0.0
    %339 = vmatpush2.msra.mxu0 0.0
    %340 = vmatprep.subr.mxu0 0.0
    %341 = vmatpush2.msra.mxu0 0.0
    %342 = vmatprep.subr.mxu0 0.0
    %343 = vmatpush2.msra.mxu0 0.0
    %344 = vmatprep.subr.mxu0 0.0
    %345 = vmatpush2.msra.mxu0 0.0
    %346 = vmatprep.subr.mxu0 0.0
    %347 = vmatpush2.msra.mxu0 0.0
    %348 = vmatprep.subr.mxu0 0.0
    %349 = vmatpush2.msra.mxu0 0.0
    %350 = vmatprep.subr.mxu0 0.0
    %351 = vmatpush2.msra.mxu0 0.0
    %352 = vmatprep.subr.mxu0 0.0
    %353 = vmatpush2.msra.mxu0 0.0
    %354 = vmatprep.subr.mxu0 0.0
    %355 = vmatpush2.msra.mxu0 0.0
    %356 = vmatprep.subr.mxu0 0.0
    %357 = vmatpush2.msra.mxu0 0.0
    %358 = vmatprep.subr.mxu0 0.0
    %359 = vmatpush2.msra.mxu0 0.0
    %360 = vmatprep.subr.mxu0 0.0
    %361 = vmatpush2.msra.mxu0 0.0
    %362 = vmatprep.subr.mxu0 0.0
    %363 = vmatpush2.msra.mxu0 0.0
    %364 = vmatprep.subr.mxu0 0.0
    %365 = vmatpush2.msra.mxu0 0.0
    %366 = vmatprep.subr.mxu0 0.0
    %367 = vmatpush2.msra.mxu0 0.0
    %368 = vmatprep.subr.mxu0 0.0
    %369 = vmatpush2.msra.mxu0 0.0
    %370 = vmatprep.mubr.f32.mxu0 0.0
    %v371 = vand.u32 %v150, 4294901760
    %v372 = vsub.f32 %v150, %v371
    %373 = vmatmul.mubr.f32.gmra.mxu0 %v372
    %v374 = vpop.f32.mrf.mxu0
    %v375 = vadd.f32 %v301, %v374
    %v376 = vpop.f32.mrf.mxu0
    %377 = vdwg.mxu0
    %378 = vmatprep.subr.mxu0 0.0
    %379 = vmatpush1.msra.mxu0 0.0
    %380 = vmatprep.subr.mxu0 0.0
    %381 = vmatpush1.msra.mxu0 0.0
    %382 = vmatprep.subr.mxu0 0.0
    %383 = vmatpush1.msra.mxu0 0.0
    %384 = vmatprep.subr.mxu0 0.0
    %385 = vmatpush1.msra.mxu0 0.0
    %386 = vmatprep.subr.mxu0 0.0
    %387 = vmatpush1.msra.mxu0 0.0
    %388 = vmatprep.subr.mxu0 0.0
    %389 = vmatpush1.msra.mxu0 0.0
    %390 = vmatprep.subr.mxu0 0.0
    %391 = vmatpush1.msra.mxu0 0.0
    %392 = vmatprep.subr.mxu0 0.0
    %393 = vmatpush1.msra.mxu0 0.0
    %394 = vmatprep.subr.mxu0 0.0
    %395 = vmatpush1.msra.mxu0 0.0
    %396 = vmatprep.subr.mxu0 0.0
    %397 = vmatpush1.msra.mxu0 0.0
    %398 = vmatprep.subr.mxu0 0.0
    %399 = vmatpush1.msra.mxu0 0.0
    %400 = vmatprep.subr.mxu0 0.0
    %401 = vmatpush1.msra.mxu0 0.0
    %402 = vmatprep.subr.mxu0 0.0
    %403 = vmatpush1.msra.mxu0 0.0
    %404 = vmatprep.subr.mxu0 0.0
    %405 = vmatpush1.msra.mxu0 0.0
    %406 = vmatprep.subr.mxu0 0.0
    %407 = vmatpush1.msra.mxu0 0.0
    %408 = vmatprep.subr.mxu0 0.0
    %v409 = vand.u32 %v140, 4294901760
    %410 = vmatpush1.msra.mxu0 %v409
    %411 = vmatprep.subr.mxu0 0.0
    %412 = vmatpush2.msra.mxu0 0.0
    %413 = vmatprep.subr.mxu0 0.0
    %414 = vmatpush2.msra.mxu0 0.0
    %415 = vmatprep.subr.mxu0 0.0
    %416 = vmatpush2.msra.mxu0 0.0
    %417 = vmatprep.subr.mxu0 0.0
    %418 = vmatpush2.msra.mxu0 0.0
    %419 = vmatprep.subr.mxu0 0.0
    %420 = vmatpush2.msra.mxu0 0.0
    %421 = vmatprep.subr.mxu0 0.0
    %422 = vmatpush2.msra.mxu0 0.0
    %423 = vmatprep.subr.mxu0 0.0
    %424 = vmatpush2.msra.mxu0 0.0
    %425 = vmatprep.subr.mxu0 0.0
    %426 = vmatpush2.msra.mxu0 0.0
    %427 = vmatprep.subr.mxu0 0.0
    %428 = vmatpush2.msra.mxu0 0.0
    %429 = vmatprep.subr.mxu0 0.0
    %430 = vmatpush2.msra.mxu0 0.0
    %431 = vmatprep.subr.mxu0 0.0
    %432 = vmatpush2.msra.mxu0 0.0
    %433 = vmatprep.subr.mxu0 0.0
    %434 = vmatpush2.msra.mxu0 0.0
    %435 = vmatprep.subr.mxu0 0.0
    %436 = vmatpush2.msra.mxu0 0.0
    %437 = vmatprep.subr.mxu0 0.0
    %438 = vmatpush2.msra.mxu0 0.0
    %439 = vmatprep.subr.mxu0 0.0
    %440 = vmatpush2.msra.mxu0 0.0
    %441 = vmatprep.subr.mxu0 0.0
    %442 = vmatpush2.msra.mxu0 0.0
    %443 = vmatprep.mubr.f32.mxu0 0.0
    %v444 = vand.u32 %v150, 4294901760
    %v445 = vsub.f32 %v150, %v444
    %v446 = vand.u32 %v445, 4294901760
    %447 = vmatmul.mubr.f32.gmra.mxu0 %v446
    %v448 = vpop.f32.mrf.mxu0
    %v449 = vadd.f32 %v375, %v448
    %v450 = vpop.f32.mrf.mxu0
    %451 = vdwg.mxu0
    %452 = vmatprep.subr.mxu0 0.0
    %453 = vmatpush1.msra.mxu0 0.0
    %454 = vmatprep.subr.mxu0 0.0
    %455 = vmatpush1.msra.mxu0 0.0
    %456 = vmatprep.subr.mxu0 0.0
    %457 = vmatpush1.msra.mxu0 0.0
    %458 = vmatprep.subr.mxu0 0.0
    %459 = vmatpush1.msra.mxu0 0.0
    %460 = vmatprep.subr.mxu0 0.0
    %461 = vmatpush1.msra.mxu0 0.0
    %462 = vmatprep.subr.mxu0 0.0
    %463 = vmatpush1.msra.mxu0 0.0
    %464 = vmatprep.subr.mxu0 0.0
    %465 = vmatpush1.msra.mxu0 0.0
    %466 = vmatprep.subr.mxu0 0.0
    %467 = vmatpush1.msra.mxu0 0.0
    %468 = vmatprep.subr.mxu0 0.0
    %469 = vmatpush1.msra.mxu0 0.0
    %470 = vmatprep.subr.mxu0 0.0
    %471 = vmatpush1.msra.mxu0 0.0
    %472 = vmatprep.subr.mxu0 0.0
    %473 = vmatpush1.msra.mxu0 0.0
    %474 = vmatprep.subr.mxu0 0.0
    %475 = vmatpush1.msra.mxu0 0.0
    %476 = vmatprep.subr.mxu0 0.0
    %477 = vmatpush1.msra.mxu0 0.0
    %478 = vmatprep.subr.mxu0 0.0
    %479 = vmatpush1.msra.mxu0 0.0
    %480 = vmatprep.subr.mxu0 0.0
    %481 = vmatpush1.msra.mxu0 0.0
    %482 = vmatprep.subr.mxu0 0.0
    %v483 = vand.u32 %v140, 4294901760
    %v484 = vsub.f32 %v140, %v483
    %v485 = vand.u32 %v484, 4294901760
    %486 = vmatpush1.msra.mxu0 %v485
    %487 = vmatprep.subr.mxu0 0.0
    %488 = vmatpush2.msra.mxu0 0.0
    %489 = vmatprep.subr.mxu0 0.0
    %490 = vmatpush2.msra.mxu0 0.0
    %491 = vmatprep.subr.mxu0 0.0
    %492 = vmatpush2.msra.mxu0 0.0
    %493 = vmatprep.subr.mxu0 0.0
    %494 = vmatpush2.msra.mxu0 0.0
    %495 = vmatprep.subr.mxu0 0.0
    %496 = vmatpush2.msra.mxu0 0.0
    %497 = vmatprep.subr.mxu0 0.0
    %498 = vmatpush2.msra.mxu0 0.0
    %499 = vmatprep.subr.mxu0 0.0
    %500 = vmatpush2.msra.mxu0 0.0
    %501 = vmatprep.subr.mxu0 0.0
    %502 = vmatpush2.msra.mxu0 0.0
    %503 = vmatprep.subr.mxu0 0.0
    %504 = vmatpush2.msra.mxu0 0.0
    %505 = vmatprep.subr.mxu0 0.0
    %506 = vmatpush2.msra.mxu0 0.0
    %507 = vmatprep.subr.mxu0 0.0
    %508 = vmatpush2.msra.mxu0 0.0
    %509 = vmatprep.subr.mxu0 0.0
    %510 = vmatpush2.msra.mxu0 0.0
    %511 = vmatprep.subr.mxu0 0.0
    %512 = vmatpush2.msra.mxu0 0.0
    %513 = vmatprep.subr.mxu0 0.0
    %514 = vmatpush2.msra.mxu0 0.0
    %515 = vmatprep.subr.mxu0 0.0
    %516 = vmatpush2.msra.mxu0 0.0
    %517 = vmatprep.subr.mxu0 0.0
    %518 = vmatpush2.msra.mxu0 0.0
    %519 = vmatprep.mubr.f32.mxu0 0.0
    %v520 = vand.u32 %v150, 4294901760
    %521 = vmatmul.mubr.f32.gmra.mxu0 %v520
    %v522 = vpop.f32.mrf.mxu0
    %v523 = vadd.f32 %v449, %v522
    %v524 = vpop.f32.mrf.mxu0
    %525 = vdwg.mxu0
    %526 = vmatprep.subr.mxu0 0.0
    %527 = vmatpush1.msra.mxu0 0.0
    %528 = vmatprep.subr.mxu0 0.0
    %529 = vmatpush1.msra.mxu0 0.0
    %530 = vmatprep.subr.mxu0 0.0
    %531 = vmatpush1.msra.mxu0 0.0
    %532 = vmatprep.subr.mxu0 0.0
    %533 = vmatpush1.msra.mxu0 0.0
    %534 = vmatprep.subr.mxu0 0.0
    %535 = vmatpush1.msra.mxu0 0.0
    %536 = vmatprep.subr.mxu0 0.0
    %537 = vmatpush1.msra.mxu0 0.0
    %538 = vmatprep.subr.mxu0 0.0
    %539 = vmatpush1.msra.mxu0 0.0
    %540 = vmatprep.subr.mxu0 0.0
    %541 = vmatpush1.msra.mxu0 0.0
    %542 = vmatprep.subr.mxu0 0.0
    %543 = vmatpush1.msra.mxu0 0.0
    %544 = vmatprep.subr.mxu0 0.0
    %545 = vmatpush1.msra.mxu0 0.0
    %546 = vmatprep.subr.mxu0 0.0
    %547 = vmatpush1.msra.mxu0 0.0
    %548 = vmatprep.subr.mxu0 0.0
    %549 = vmatpush1.msra.mxu0 0.0
    %550 = vmatprep.subr.mxu0 0.0
    %551 = vmatpush1.msra.mxu0 0.0
    %552 = vmatprep.subr.mxu0 0.0
    %553 = vmatpush1.msra.mxu0 0.0
    %554 = vmatprep.subr.mxu0 0.0
    %555 = vmatpush1.msra.mxu0 0.0
    %556 = vmatprep.subr.mxu0 0.0
    %v557 = vand.u32 %v140, 4294901760
    %558 = vmatpush1.msra.mxu0 %v557
    %559 = vmatprep.subr.mxu0 0.0
    %560 = vmatpush2.msra.mxu0 0.0
    %561 = vmatprep.subr.mxu0 0.0
    %562 = vmatpush2.msra.mxu0 0.0
    %563 = vmatprep.subr.mxu0 0.0
    %564 = vmatpush2.msra.mxu0 0.0
    %565 = vmatprep.subr.mxu0 0.0
    %566 = vmatpush2.msra.mxu0 0.0
    %567 = vmatprep.subr.mxu0 0.0
    %568 = vmatpush2.msra.mxu0 0.0
    %569 = vmatprep.subr.mxu0 0.0
    %570 = vmatpush2.msra.mxu0 0.0
    %571 = vmatprep.subr.mxu0 0.0
    %572 = vmatpush2.msra.mxu0 0.0
    %573 = vmatprep.subr.mxu0 0.0
    %574 = vmatpush2.msra.mxu0 0.0
    %575 = vmatprep.subr.mxu0 0.0
    %576 = vmatpush2.msra.mxu0 0.0
    %577 = vmatprep.subr.mxu0 0.0
    %578 = vmatpush2.msra.mxu0 0.0
    %579 = vmatprep.subr.mxu0 0.0
    %580 = vmatpush2.msra.mxu0 0.0
    %581 = vmatprep.subr.mxu0 0.0
    %582 = vmatpush2.msra.mxu0 0.0
    %583 = vmatprep.subr.mxu0 0.0
    %584 = vmatpush2.msra.mxu0 0.0
    %585 = vmatprep.subr.mxu0 0.0
    %586 = vmatpush2.msra.mxu0 0.0
    %587 = vmatprep.subr.mxu0 0.0
    %588 = vmatpush2.msra.mxu0 0.0
    %589 = vmatprep.subr.mxu0 0.0
    %590 = vmatpush2.msra.mxu0 0.0
    %591 = vmatprep.mubr.f32.mxu0 0.0
    %v592 = vand.u32 %v150, 4294901760
    %593 = vmatmul.mubr.f32.gmra.mxu0 %v592
    %v594 = vpop.f32.mrf.mxu0
    %v595 = vadd.f32 %v523, %v594
    %v596 = vpop.f32.mrf.mxu0
    %597 = vdwg.mxu0
    %v598 = vand.u32 2147483647, %v595
    %vm599 = vcmp.le.f32.partialorder %v598, 0.7853982
    %vm600 = vcmp.lt.s32.totalorder %v595, 0
    %v601 = vand.u32 %v595, 2139095040
    %v602 = vshrl.u32 %v601, 23
    %v603 = vsub.s32 %v602, 127
    %v604 = vand.u32 2147483647, %v595
    %v605 = vand.u32 %v604, 8388607
    %v606 = vor.u32 %v605, 8388608
    %v607 = vsub.s32 0, %v606
    %v608 = vadd.s32 %v603, 1
    %vm609 = vcmp.gt.s32.totalorder %v608, 0
    %v610 = vsel %vm609, %v608, 0
    %v611 = vshrl.u32 %v610, 5
    %v612 = vand.u32 %v610, 31
    %v613 = vsub.s32 32, %v612
    %v614 = vshrl.u32 683565275, %v613
    %v615 = vshll.u32 683565275, %v612
    %v616 = vshrl.u32 2475754826, %v613
    %v617 = vor.u32 %v615, %v616
    %v618 = vshll.u32 2475754826, %v612
    %v619 = vshrl.u32 2131351028, %v613
    %v620 = vor.u32 %v618, %v619
    %v621 = vshll.u32 2131351028, %v612
    %v622 = vshrl.u32 2102212464, %v613
    %v623 = vor.u32 %v621, %v622
    %v624 = vshll.u32 2102212464, %v612
    %v625 = vshrl.u32 920167782, %v613
    %v626 = vor.u32 %v624, %v625
    %v627 = vshll.u32 920167782, %v612
    %v628 = vshrl.u32 1326507024, %v613
    %v629 = vor.u32 %v627, %v628
    %vm630 = vcmp.lt.s32.totalorder %v611, 1
    %vm631 = vcmp.lt.s32.totalorder %v611, 2
    %vm632 = vcmp.lt.s32.totalorder %v611, 3
    %vm633 = vcmp.lt.s32.totalorder %v611, 4
    %v634 = vsel %vm630, %v614, %v617
    %v635 = vsel %vm633, %v623, 2102212464
    %v636 = vsel %vm632, %v620, %v635
    %v637 = vsel %vm631, %v634, %v636
    %v638 = vsel %vm630, %v617, %v620
    %v639 = vsel %vm633, %v626, 920167782
    %v640 = vsel %vm632, %v623, %v639
    %v641 = vsel %vm631, %v638, %v640
    %v642 = vsel %vm630, %v620, %v623
    %v643 = vsel %vm633, %v629, 1326507024
    %v644 = vsel %vm632, %v626, %v643
    %v645 = vsel %vm631, %v642, %v644
    %v646 = vshll.u32 %v606, 8
    %v647 = vmul.u32.u64.compose %v646, %v645
    %v648 = vextract.low.u32 %v647
    %v649 = vextract.high.u32 %v647
    %v650 = vmul.u32.u64.compose %v646, %v641
    %v651 = vextract.low.u32 %v650
    %v652 = vextract.high.u32 %v650
    %v653 = vmul.u32 %v646, %v637
    %v654 = vadd.s32 %v649, %v651
    %vm655 = vc.u32 %v649, %v651
    %v656 = vadd.s32 %v652, 1
    %v657 = vsel %vm655, %v656, %v652
    %v658 = vadd.s32 %v653, %v657
    %v659 = vadd.s32 %v658, 536870912
    %v660 = vshrl.u32 %v659, 30
    %v661 = vshll.u32 %v660, 30
    %v662 = vsub.s32 %v658, %v661
    %vm663 = vcmp.lt.s32.totalorder %v662, 0
    %v664 = vsub.s32 0, %v662
    %v665 = vsel %vm663, %v664, %v662
    %v666 = vclz %v665
    %v667 = vsub.s32 %v666, 2
    %vm668 = vcmp.gt.s32.totalorder 0, %v667
    %v669 = vsel %vm668, 0, %v667
    %v670 = vsub.s32 32, %v669
    %v671 = vshll.u32 %v662, %v669
    %v672 = vshrl.u32 %v654, %v670
    %v673 = vor.u32 %v671, %v672
    %v674 = vsub.s32 4294967266, %v669
    %v675 = vadd.s32 %v674, 127
    %v676 = vshll.u32 %v675, 23
    %v677 = vor.u32 4788187, %v676
    %v678 = vand.u32 2147483647, %v677
    %v680 = vcvt.s32.f32 %v673
    %v681 = vmul.f32 %v680, %v678
    %v682 = vxor.u32 %v681, 2147483648
    %v683 = vsel %vm600, %v682, %v681
    %v684 = vsub.s32 4, %v660
    %v685 = vsel %vm600, %v684, %v660
    %v686 = vsel %vm599, %v595, %v683
    %v687 = vsel %vm599, 0, %v685
    %v688 = vcosq.f32.pop %v686
    %v689 = vsinq.f32.pop %v686
    %vm690 = vweird.f32 %v595
    %v691 = vadd.s32 %v687, 3
    %v692 = vand.u32 %v691, 3
    %vm693 = vcmp.lt.s32.totalorder %v692, 2
    %vm694 = vcmp.eq.s32.totalorder %v692, 0
    %v695 = vxor.u32 %v689, 2147483648
    %v696 = vsel %vm694, %v688, %v695
    %vm697 = vcmp.eq.s32.totalorder %v692, 2
    %v698 = vxor.u32 %v688, 2147483648
    %v699 = vsel %vm697, %v698, %v689
    %v700 = vsel %vm693, %v696, %v699
    %v701 = vsel %vm690, nan, %v700
    %v702 = vpack.c.bf16 %v139, %v139
    %v703 = vld [vmem:[#allocation4] sm:$0xf]
    %v704 = vpack.c.bf16 %v701, %v701
    %v705 = vld [vmem:[%s4] sm:$0xf]
    %v706 = vld [vmem:[%s4 + $0x4] sm:$0xf]
    %v707 = vld [vmem:[%s4 + $0x8] sm:$0xf]
    %v708 = vld [vmem:[%s4 + $0xc] sm:$0xf]
    %v709 = vld [vmem:[%s4 + $0x10] sm:$0xf]
    %v710 = vld [vmem:[%s4 + $0x14] sm:$0xf]
    %v711 = vld [vmem:[%s4 + $0x18] sm:$0xf]
    %v712 = vld [vmem:[%s4 + $0x1c] sm:$0xf]
    %v713 = vld [vmem:[%s4 + $0x20] sm:$0xf]
    %v714 = vld [vmem:[%s4 + $0x24] sm:$0xf]
    %v715 = vld [vmem:[%s4 + $0x28] sm:$0xf]
    %v716 = vld [vmem:[%s4 + $0x2c] sm:$0xf]
    %v717 = vld [vmem:[%s4 + $0x30] sm:$0xf]
    %v718 = vld [vmem:[%s4 + $0x34] sm:$0xf]
    %v719 = vld [vmem:[%s4 + $0x38] sm:$0xf]
    %v720 = vld [vmem:[%s4 + $0x3c] sm:$0xf]
    %v737 = vunpack.c.l.b16 %v705
    %v738 = vunpack.c.l.b16 %v706
    %v739 = vunpack.c.l.b16 %v707
    %v740 = vunpack.c.l.b16 %v708
    %v741 = vunpack.c.l.b16 %v709
    %v742 = vunpack.c.l.b16 %v710
    %v743 = vunpack.c.l.b16 %v711
    %v744 = vunpack.c.l.b16 %v712
    %v745 = vunpack.c.l.b16 %v713
    %v746 = vunpack.c.l.b16 %v714
    %v747 = vunpack.c.l.b16 %v715
    %v748 = vunpack.c.l.b16 %v716
    %v749 = vunpack.c.l.b16 %v717
    %v750 = vunpack.c.l.b16 %v718
    %v751 = vunpack.c.l.b16 %v719
    %v752 = vunpack.c.l.b16 %v720
    %v753 = vpack.c.b16 %v738, %v737
    %v754 = vpack.c.b16 %v740, %v739
    %v755 = vpack.c.b16 %v742, %v741
    %v756 = vpack.c.b16 %v744, %v743
    %v757 = vpack.c.b16 %v746, %v745
    %v758 = vpack.c.b16 %v748, %v747
    %v759 = vpack.c.b16 %v750, %v749
    %v760 = vpack.c.b16 %v752, %v751
    %769 = vmatprep.subr.bf16.mxu0 0
    %770 = vmatpush1.bf16.msra.mxu0 %v760
    %771 = vmatprep.subr.bf16.mxu0 0
    %772 = vmatpush1.bf16.msra.mxu0 %v759
    %773 = vmatprep.subr.bf16.mxu0 0
    %774 = vmatpush1.bf16.msra.mxu0 %v758
    %775 = vmatprep.subr.bf16.mxu0 0
    %776 = vmatpush1.bf16.msra.mxu0 %v757
    %777 = vmatprep.subr.bf16.mxu0 0
    %778 = vmatpush1.bf16.msra.mxu0 %v756
    %779 = vmatprep.subr.bf16.mxu0 0
    %780 = vmatpush1.bf16.msra.mxu0 %v755
    %781 = vmatprep.subr.bf16.mxu0 0
    %782 = vmatpush1.bf16.msra.mxu0 %v754
    %783 = vmatprep.subr.bf16.mxu0 0
    %784 = vmatpush1.bf16.msra.mxu0 %v753
    %785 = vmatprep.subr.bf16.mxu0 0
    %786 = vmatpush2.bf16.msra.mxu0 0
    %787 = vmatprep.subr.bf16.mxu0 0
    %788 = vmatpush2.bf16.msra.mxu0 0
    %789 = vmatprep.subr.bf16.mxu0 0
    %790 = vmatpush2.bf16.msra.mxu0 0
    %791 = vmatprep.subr.bf16.mxu0 0
    %792 = vmatpush2.bf16.msra.mxu0 0
    %793 = vmatprep.subr.bf16.mxu0 0
    %794 = vmatpush2.bf16.msra.mxu0 0
    %795 = vmatprep.subr.bf16.mxu0 0
    %796 = vmatpush2.bf16.msra.mxu0 0
    %797 = vmatprep.subr.bf16.mxu0 0
    %798 = vmatpush2.bf16.msra.mxu0 0
    %799 = vmatprep.subr.bf16.mxu0 0
    %800 = vmatpush2.bf16.msra.mxu0 0
    %801 = vmatprep.mubr.bf16.mxu0 0
    %802 = vmatmul.mubr.bf16.gmra.mxu0 %v704
    %v803 = vpop.f32.mrf.mxu0
    %v804 = vadd.f32 0.0, %v803
    %v805 = vpop.f32.mrf.mxu0
    %v806 = vpop.f32.mrf.mxu0
    %v807 = vpop.f32.mrf.mxu0
    %808 = vdwg.mxu0
    %v810 = vsel %vm148, %v702, 0
    %vm812 = vcmask 1043456
    %v814 = vsel %vm812, %v703, 0
    %816 = vmatprep.subr.bf16.mxu0 0
    %817 = vmatpush1.bf16.msra.mxu0 0
    %818 = vmatprep.subr.bf16.mxu0 0
    %819 = vmatpush1.bf16.msra.mxu0 0
    %820 = vmatprep.subr.bf16.mxu0 0
    %821 = vmatpush1.bf16.msra.mxu0 0
    %822 = vmatprep.subr.bf16.mxu0 0
    %823 = vmatpush1.bf16.msra.mxu0 0
    %824 = vmatprep.subr.bf16.mxu0 0
    %825 = vmatpush1.bf16.msra.mxu0 0
    %826 = vmatprep.subr.bf16.mxu0 0
    %827 = vmatpush1.bf16.msra.mxu0 0
    %828 = vmatprep.subr.bf16.mxu0 0
    %829 = vmatpush1.bf16.msra.mxu0 0
    %830 = vmatprep.subr.bf16.mxu0 0
    %831 = vmatpush1.bf16.msra.mxu0 %v814
    %832 = vmatprep.subr.bf16.mxu0 0
    %833 = vmatpush2.bf16.msra.mxu0 0
    %834 = vmatprep.subr.bf16.mxu0 0
    %835 = vmatpush2.bf16.msra.mxu0 0
    %836 = vmatprep.subr.bf16.mxu0 0
    %837 = vmatpush2.bf16.msra.mxu0 0
    %838 = vmatprep.subr.bf16.mxu0 0
    %839 = vmatpush2.bf16.msra.mxu0 0
    %840 = vmatprep.subr.bf16.mxu0 0
    %841 = vmatpush2.bf16.msra.mxu0 0
    %842 = vmatprep.subr.bf16.mxu0 0
    %843 = vmatpush2.bf16.msra.mxu0 0
    %844 = vmatprep.subr.bf16.mxu0 0
    %845 = vmatpush2.bf16.msra.mxu0 0
    %846 = vmatprep.subr.bf16.mxu0 0
    %847 = vmatpush2.bf16.msra.mxu0 0
    %848 = vmatprep.mubr.bf16.mxu0 0
    %849 = vmatmul.mubr.bf16.gmra.mxu0 %v810
    %v850 = vpop.f32.mrf.mxu0
    %v851 = vadd.f32 %v804, %v850
    %v852 = vpop.f32.mrf.mxu0
    %v853 = vpop.f32.mrf.mxu0
    %v854 = vpop.f32.mrf.mxu0
    %855 = vdwg.mxu0
    %v856 = vld [vmem:[#allocation6] sm:$0x1]
    %v858 = vlaneseq
    %v859 = vshrl.u32 %v858, 7
    %v860 = vsub.s32 0, %v859
    %v861 = vrot.slane %v856, %v860
    %v863 = vadd.f32 %v851, %v861
    %vm864 = vcmp.ge.f32.partialorder %v863, 0.0
    %v865 = vmul.f32 %v863, 0.2
    %v866 = vsel %vm864, %v863, %v865
    %v867 = vpack.c.bf16 %v866, %v866
    %v868 = vld [vmem:[#allocation7] sm:$0xf]
    %v869 = vld [vmem:[#allocation7 + $0x4] sm:$0xf]
    %v870 = vld [vmem:[#allocation7 + $0x8] sm:$0xf]
    %v871 = vld [vmem:[#allocation7 + $0xc] sm:$0xf]
    %v872 = vld [vmem:[#allocation7 + $0x10] sm:$0xf]
    %v873 = vld [vmem:[#allocation7 + $0x14] sm:$0xf]
    %v874 = vld [vmem:[#allocation7 + $0x18] sm:$0xf]
    %v875 = vld [vmem:[#allocation7 + $0x1c] sm:$0xf]
    %v876 = vld [vmem:[#allocation7 + $0x20] sm:$0xf]
    %v877 = vld [vmem:[#allocation7 + $0x24] sm:$0xf]
    %v878 = vld [vmem:[#allocation7 + $0x28] sm:$0xf]
    %v879 = vld [vmem:[#allocation7 + $0x2c] sm:$0xf]
    %v880 = vld [vmem:[#allocation7 + $0x30] sm:$0xf]
    %v881 = vld [vmem:[#allocation7 + $0x34] sm:$0xf]
    %v882 = vld [vmem:[#allocation7 + $0x38] sm:$0xf]
    %v883 = vld [vmem:[#allocation7 + $0x3c] sm:$0xf]
    %v884 = vld [vmem:[#allocation9] sm:$0x1]
    %v886 = vlaneseq
    %v887 = vshrl.u32 %v886, 7
    %v888 = vsub.s32 0, %v887
    %v889 = vrot.slane %v884, %v888
    %v907 = vunpack.c.l.b16 %v868
    %v908 = vunpack.c.l.b16 %v869
    %v909 = vunpack.c.l.b16 %v870
    %v910 = vunpack.c.l.b16 %v871
    %v911 = vunpack.c.l.b16 %v872
    %v912 = vunpack.c.l.b16 %v873
    %v913 = vunpack.c.l.b16 %v874
    %v914 = vunpack.c.l.b16 %v875
    %v915 = vunpack.c.l.b16 %v876
    %v916 = vunpack.c.l.b16 %v877
    %v917 = vunpack.c.l.b16 %v878
    %v918 = vunpack.c.l.b16 %v879
    %v919 = vunpack.c.l.b16 %v880
    %v920 = vunpack.c.l.b16 %v881
    %v921 = vunpack.c.l.b16 %v882
    %v922 = vunpack.c.l.b16 %v883
    %v923 = vpack.c.b16 %v908, %v907
    %v924 = vpack.c.b16 %v910, %v909
    %v925 = vpack.c.b16 %v912, %v911
    %v926 = vpack.c.b16 %v914, %v913
    %v927 = vpack.c.b16 %v916, %v915
    %v928 = vpack.c.b16 %v918, %v917
    %v929 = vpack.c.b16 %v920, %v919
    %v930 = vpack.c.b16 %v922, %v921
    %939 = vmatprep.subr.bf16.mxu0 0
    %940 = vmatpush1.bf16.msra.mxu0 %v930
    %941 = vmatprep.subr.bf16.mxu0 0
    %942 = vmatpush1.bf16.msra.mxu0 %v929
    %943 = vmatprep.subr.bf16.mxu0 0
    %944 = vmatpush1.bf16.msra.mxu0 %v928
    %945 = vmatprep.subr.bf16.mxu0 0
    %946 = vmatpush1.bf16.msra.mxu0 %v927
    %947 = vmatprep.subr.bf16.mxu0 0
    %948 = vmatpush1.bf16.msra.mxu0 %v926
    %949 = vmatprep.subr.bf16.mxu0 0
    %950 = vmatpush1.bf16.msra.mxu0 %v925
    %951 = vmatprep.subr.bf16.mxu0 0
    %952 = vmatpush1.bf16.msra.mxu0 %v924
    %953 = vmatprep.subr.bf16.mxu0 0
    %954 = vmatpush1.bf16.msra.mxu0 %v923
    %955 = vmatprep.subr.bf16.mxu0 0
    %956 = vmatpush2.bf16.msra.mxu0 0
    %957 = vmatprep.subr.bf16.mxu0 0
    %958 = vmatpush2.bf16.msra.mxu0 0
    %959 = vmatprep.subr.bf16.mxu0 0
    %960 = vmatpush2.bf16.msra.mxu0 0
    %961 = vmatprep.subr.bf16.mxu0 0
    %962 = vmatpush2.bf16.msra.mxu0 0
    %963 = vmatprep.subr.bf16.mxu0 0
    %964 = vmatpush2.bf16.msra.mxu0 0
    %965 = vmatprep.subr.bf16.mxu0 0
    %966 = vmatpush2.bf16.msra.mxu0 0
    %967 = vmatprep.subr.bf16.mxu0 0
    %968 = vmatpush2.bf16.msra.mxu0 0
    %969 = vmatprep.subr.bf16.mxu0 0
    %970 = vmatpush2.bf16.msra.mxu0 0
    %971 = vmatprep.mubr.bf16.mxu0 0
    %972 = vmatmul.mubr.bf16.gmra.mxu0 %v867
    %v973 = vpop.f32.mrf.mxu0
    %v974 = vadd.f32 %v889, %v973
    %v975 = vpop.f32.mrf.mxu0
    %v976 = vpop.f32.mrf.mxu0
    %v977 = vpop.f32.mrf.mxu0
    %978 = vdwg.mxu0
    %vm979 = vcmp.ge.f32.partialorder %v974, 0.0
    %v980 = vmul.f32 %v974, 0.2
    %v981 = vsel %vm979, %v974, %v980
    %v982 = vpack.c.bf16 %v981, %v981
    %v983 = vld [vmem:[#allocation10] sm:$0xf]
    %v984 = vld [vmem:[#allocation10 + $0x4] sm:$0xf]
    %v985 = vld [vmem:[#allocation10 + $0x8] sm:$0xf]
    %v986 = vld [vmem:[#allocation10 + $0xc] sm:$0xf]
    %v987 = vld [vmem:[#allocation10 + $0x10] sm:$0xf]
    %v988 = vld [vmem:[#allocation10 + $0x14] sm:$0xf]
    %v989 = vld [vmem:[#allocation10 + $0x18] sm:$0xf]
    %v990 = vld [vmem:[#allocation10 + $0x1c] sm:$0xf]
    %v991 = vld [vmem:[#allocation10 + $0x20] sm:$0xf]
    %v992 = vld [vmem:[#allocation10 + $0x24] sm:$0xf]
    %v993 = vld [vmem:[#allocation10 + $0x28] sm:$0xf]
    %v994 = vld [vmem:[#allocation10 + $0x2c] sm:$0xf]
    %v995 = vld [vmem:[#allocation10 + $0x30] sm:$0xf]
    %v996 = vld [vmem:[#allocation10 + $0x34] sm:$0xf]
    %v997 = vld [vmem:[#allocation10 + $0x38] sm:$0xf]
    %v998 = vld [vmem:[#allocation10 + $0x3c] sm:$0xf]
    %v999 = vld [vmem:[#allocation12] sm:$0x1]
    %v1001 = vlaneseq
    %v1002 = vshrl.u32 %v1001, 7
    %v1003 = vsub.s32 0, %v1002
    %v1004 = vrot.slane %v999, %v1003
    %v1022 = vunpack.c.l.b16 %v983
    %v1023 = vunpack.c.l.b16 %v984
    %v1024 = vunpack.c.l.b16 %v985
    %v1025 = vunpack.c.l.b16 %v986
    %v1026 = vunpack.c.l.b16 %v987
    %v1027 = vunpack.c.l.b16 %v988
    %v1028 = vunpack.c.l.b16 %v989
    %v1029 = vunpack.c.l.b16 %v990
    %v1030 = vunpack.c.l.b16 %v991
    %v1031 = vunpack.c.l.b16 %v992
    %v1032 = vunpack.c.l.b16 %v993
    %v1033 = vunpack.c.l.b16 %v994
    %v1034 = vunpack.c.l.b16 %v995
    %v1035 = vunpack.c.l.b16 %v996
    %v1036 = vunpack.c.l.b16 %v997
    %v1037 = vunpack.c.l.b16 %v998
    %v1038 = vpack.c.b16 %v1023, %v1022
    %v1039 = vpack.c.b16 %v1025, %v1024
    %v1040 = vpack.c.b16 %v1027, %v1026
    %v1041 = vpack.c.b16 %v1029, %v1028
    %v1042 = vpack.c.b16 %v1031, %v1030
    %v1043 = vpack.c.b16 %v1033, %v1032
    %v1044 = vpack.c.b16 %v1035, %v1034
    %v1045 = vpack.c.b16 %v1037, %v1036
    %1054 = vmatprep.subr.bf16.mxu0 0
    %1055 = vmatpush1.bf16.msra.mxu0 %v1045
    %1056 = vmatprep.subr.bf16.mxu0 0
    %1057 = vmatpush1.bf16.msra.mxu0 %v1044
    %1058 = vmatprep.subr.bf16.mxu0 0
    %1059 = vmatpush1.bf16.msra.mxu0 %v1043
    %1060 = vmatprep.subr.bf16.mxu0 0
    %1061 = vmatpush1.bf16.msra.mxu0 %v1042
    %1062 = vmatprep.subr.bf16.mxu0 0
    %1063 = vmatpush1.bf16.msra.mxu0 %v1041
    %1064 = vmatprep.subr.bf16.mxu0 0
    %1065 = vmatpush1.bf16.msra.mxu0 %v1040
    %1066 = vmatprep.subr.bf16.mxu0 0
    %1067 = vmatpush1.bf16.msra.mxu0 %v1039
    %1068 = vmatprep.subr.bf16.mxu0 0
    %1069 = vmatpush1.bf16.msra.mxu0 %v1038
    %1070 = vmatprep.subr.bf16.mxu0 0
    %1071 = vmatpush2.bf16.msra.mxu0 0
    %1072 = vmatprep.subr.bf16.mxu0 0
    %1073 = vmatpush2.bf16.msra.mxu0 0
    %1074 = vmatprep.subr.bf16.mxu0 0
    %1075 = vmatpush2.bf16.msra.mxu0 0
    %1076 = vmatprep.subr.bf16.mxu0 0
    %1077 = vmatpush2.bf16.msra.mxu0 0
    %1078 = vmatprep.subr.bf16.mxu0 0
    %1079 = vmatpush2.bf16.msra.mxu0 0
    %1080 = vmatprep.subr.bf16.mxu0 0
    %1081 = vmatpush2.bf16.msra.mxu0 0
    %1082 = vmatprep.subr.bf16.mxu0 0
    %1083 = vmatpush2.bf16.msra.mxu0 0
    %1084 = vmatprep.subr.bf16.mxu0 0
    %1085 = vmatpush2.bf16.msra.mxu0 0
    %1086 = vmatprep.mubr.bf16.mxu0 0
    %1087 = vmatmul.mubr.bf16.gmra.mxu0 %v982
    %v1088 = vpop.f32.mrf.mxu0
    %v1089 = vadd.f32 %v1004, %v1088
    %v1090 = vpop.f32.mrf.mxu0
    %v1091 = vpop.f32.mrf.mxu0
    %v1092 = vpop.f32.mrf.mxu0
    %1093 = vdwg.mxu0
    %vm1094 = vcmp.ge.f32.partialorder %v1089, 0.0
    %v1095 = vmul.f32 %v1089, 0.2
    %v1096 = vsel %vm1094, %v1089, %v1095
    %v1097 = vpack.c.bf16 %v1096, %v1096
    %v1098 = vld [vmem:[%s10] sm:$0xf]
    %v1099 = vld [vmem:[%s10 + $0x4] sm:$0xf]
    %v1100 = vld [vmem:[%s10 + $0x8] sm:$0xf]
    %v1101 = vld [vmem:[%s10 + $0xc] sm:$0xf]
    %v1102 = vld [vmem:[%s10 + $0x10] sm:$0xf]
    %v1103 = vld [vmem:[%s10 + $0x14] sm:$0xf]
    %v1104 = vld [vmem:[%s10 + $0x18] sm:$0xf]
    %v1105 = vld [vmem:[%s10 + $0x1c] sm:$0xf]
    %v1106 = vld [vmem:[%s10 + $0x20] sm:$0xf]
    %v1107 = vld [vmem:[%s10 + $0x24] sm:$0xf]
    %v1108 = vld [vmem:[%s10 + $0x28] sm:$0xf]
    %v1109 = vld [vmem:[%s10 + $0x2c] sm:$0xf]
    %v1110 = vld [vmem:[%s10 + $0x30] sm:$0xf]
    %v1111 = vld [vmem:[%s10 + $0x34] sm:$0xf]
    %v1112 = vld [vmem:[%s10 + $0x38] sm:$0xf]
    %v1113 = vld [vmem:[%s10 + $0x3c] sm:$0xf]
    %v1114 = vld [vmem:[#allocation13] sm:$0x1]
    %v1116 = vlaneseq
    %v1117 = vshrl.u32 %v1116, 7
    %v1118 = vsub.s32 0, %v1117
    %v1119 = vrot.slane %v1114, %v1118
    %v1137 = vunpack.c.l.b16 %v1098
    %v1138 = vunpack.c.l.b16 %v1099
    %v1139 = vunpack.c.l.b16 %v1100
    %v1140 = vunpack.c.l.b16 %v1101
    %v1141 = vunpack.c.l.b16 %v1102
    %v1142 = vunpack.c.l.b16 %v1103
    %v1143 = vunpack.c.l.b16 %v1104
    %v1144 = vunpack.c.l.b16 %v1105
    %v1145 = vunpack.c.l.b16 %v1106
    %v1146 = vunpack.c.l.b16 %v1107
    %v1147 = vunpack.c.l.b16 %v1108
    %v1148 = vunpack.c.l.b16 %v1109
    %v1149 = vunpack.c.l.b16 %v1110
    %v1150 = vunpack.c.l.b16 %v1111
    %v1151 = vunpack.c.l.b16 %v1112
    %v1152 = vunpack.c.l.b16 %v1113
    %v1153 = vpack.c.b16 %v1138, %v1137
    %v1154 = vpack.c.b16 %v1140, %v1139
    %v1155 = vpack.c.b16 %v1142, %v1141
    %v1156 = vpack.c.b16 %v1144, %v1143
    %v1157 = vpack.c.b16 %v1146, %v1145
    %v1158 = vpack.c.b16 %v1148, %v1147
    %v1159 = vpack.c.b16 %v1150, %v1149
    %v1160 = vpack.c.b16 %v1152, %v1151
    %1169 = vmatprep.subr.bf16.mxu0 0
    %1170 = vmatpush1.bf16.msra.mxu0 %v1160
    %1171 = vmatprep.subr.bf16.mxu0 0
    %1172 = vmatpush1.bf16.msra.mxu0 %v1159
    %1173 = vmatprep.subr.bf16.mxu0 0
    %1174 = vmatpush1.bf16.msra.mxu0 %v1158
    %1175 = vmatprep.subr.bf16.mxu0 0
    %1176 = vmatpush1.bf16.msra.mxu0 %v1157
    %1177 = vmatprep.subr.bf16.mxu0 0
    %1178 = vmatpush1.bf16.msra.mxu0 %v1156
    %1179 = vmatprep.subr.bf16.mxu0 0
    %1180 = vmatpush1.bf16.msra.mxu0 %v1155
    %1181 = vmatprep.subr.bf16.mxu0 0
    %1182 = vmatpush1.bf16.msra.mxu0 %v1154
    %1183 = vmatprep.subr.bf16.mxu0 0
    %1184 = vmatpush1.bf16.msra.mxu0 %v1153
    %1185 = vmatprep.subr.bf16.mxu0 0
    %1186 = vmatpush2.bf16.msra.mxu0 0
    %1187 = vmatprep.subr.bf16.mxu0 0
    %1188 = vmatpush2.bf16.msra.mxu0 0
    %1189 = vmatprep.subr.bf16.mxu0 0
    %1190 = vmatpush2.bf16.msra.mxu0 0
    %1191 = vmatprep.subr.bf16.mxu0 0
    %1192 = vmatpush2.bf16.msra.mxu0 0
    %1193 = vmatprep.subr.bf16.mxu0 0
    %1194 = vmatpush2.bf16.msra.mxu0 0
    %1195 = vmatprep.subr.bf16.mxu0 0
    %1196 = vmatpush2.bf16.msra.mxu0 0
    %1197 = vmatprep.subr.bf16.mxu0 0
    %1198 = vmatpush2.bf16.msra.mxu0 0
    %1199 = vmatprep.subr.bf16.mxu0 0
    %1200 = vmatpush2.bf16.msra.mxu0 0
    %1201 = vmatprep.mubr.bf16.mxu0 0
    %1202 = vmatmul.mubr.bf16.gmra.mxu0 %v1097
    %v1203 = vpop.f32.mrf.mxu0
    %v1204 = vadd.f32 %v1119, %v1203
    %v1205 = vpop.f32.mrf.mxu0
    %v1206 = vpop.f32.mrf.mxu0
    %v1207 = vpop.f32.mrf.mxu0
    %1208 = vdwg.mxu0
    %vm1209 = vcmask 31744
    %1210 = vst.msk [vmem:[%s12] sm:$0xff] %vm1209, %v1204
    // Predicated region
    $region82: #{mlp_forward.1} parent=1 // pred_check
      _
    $region83: #{mlp_forward.1} parent=1 // pred_check_branch
      %1212 = sbr.rel (0) target = $region85
    $region84: #{mlp_forward.1} parent=1 // pred_region
      _
    $region85: #{mlp_forward.1} parent=1 // pred_fallthru
      _
    // Predicated region
    $region86: #{mlp_forward.1} parent=1 // pred_check
      _
    $region87: #{mlp_forward.1} parent=1 // pred_check_branch
      %1214 = sbr.rel (0) target = $region89
    $region88: #{mlp_forward.1} parent=1 // pred_region
      _
    $region89: #{mlp_forward.1} parent=1 // pred_fallthru
      _
    %1215 = vsyncpa [#allocation3], 1
    %1216 = vsyncpa [#allocation5], 1
    %1217 = vsyncpa [#allocation8], 1
    %1218 = vsyncpa [#allocation11], 1
    %1219 = vsyncpa [#allocation14], 1

</llo_original>
